<compile_context>
chip_gen: v7x
topology: tpu7x:2x2x1
jax: 0.10.0
libtpu: 0.0.40
codegen_flags: <defaults>
</compile_context>

<pallas_src>
import functools

import jax
import jax.numpy as jnp
from jax.experimental import pallas as pl
from jax.experimental.pallas import tpu as pltpu


def _round_up(x: int, m: int) -> int:
    return ((x + m - 1) // m) * m


def _expert_matmul_kernel(x_ref, w_ref, o_ref):
    # x_ref: (TM, r)   w_ref: (r, TN)   o_ref: (TM, TN)   (expert dim squeezed)
    o_ref[...] = jnp.dot(
        x_ref[...], w_ref[...], preferred_element_type=jnp.float32
    ).astype(o_ref.dtype)


def mmoe_linear_b_stacked(x_stacked, w_stacked, *, tile_t=512, tile_o=2048):
    """x_stacked: (E, T, r), w_stacked: (E, r, O)  ->  (E, T, O).

    Both inputs must share a dtype (f32 or bf16); output has that dtype.
    """
    E, T, r = x_stacked.shape
    E2, r2, O = w_stacked.shape
    assert E == E2 and r == r2
    dtype = x_stacked.dtype
    itemsize = jnp.dtype(dtype).itemsize

    # ---- choose lane/sublane-friendly tiles and pad ------------------------
    tm = min(tile_t, _round_up(T, 8))          # multiple of 8 (sublanes)
    t_pad = _round_up(T, tm)
    tn = min(tile_o, _round_up(O, 128))        # multiple of 128 (lane-dense)
    o_pad = _round_up(O, tn)

    if t_pad != T:
        x_stacked = jnp.pad(x_stacked, ((0, 0), (0, t_pad - T), (0, 0)))
    if o_pad != O:
        w_stacked = jnp.pad(w_stacked, ((0, 0), (0, 0), (0, o_pad - O)))

    n_t = t_pad // tm
    n_o = o_pad // tn
    grid = (E, n_o, n_t)  # T tiles innermost -> weight tile reused from VMEM

    # Double-buffered working set + margin; keep well under v7x's 64 MiB.
    working = 2 * (tm * r + r * tn + tm * tn) * itemsize
    vmem_limit = int(min(max(2 * working + (4 << 20), 16 << 20), 48 << 20))

    cost = pl.CostEstimate(
        flops=2 * E * t_pad * r * o_pad,
        transcendentals=0,
        bytes_accessed=(E * t_pad * r + E * r * o_pad + E * t_pad * o_pad)
        * itemsize,
    )

    out = pl.pallas_call(
        _expert_matmul_kernel,
        out_shape=jax.ShapeDtypeStruct((E, t_pad, o_pad), dtype),
        grid_spec=pltpu.PrefetchScalarGridSpec(
            num_scalar_prefetch=0,
            grid=grid,
            in_specs=[
                # activations: (expert, T-tile, full r)
                pl.BlockSpec((pl.Squeezed(), tm, r), lambda e, n, t: (e, t, 0)),
                # weights: (expert, full r, O-tile) -- constant across t
                pl.BlockSpec((pl.Squeezed(), r, tn), lambda e, n, t: (e, 0, n)),
            ],
            out_specs=pl.BlockSpec(
                (pl.Squeezed(), tm, tn), lambda e, n, t: (e, t, n)
            ),
        ),
        compiler_params=pltpu.CompilerParams(
            dimension_semantics=("parallel", "parallel", "parallel"),
            vmem_limit_bytes=vmem_limit,
        ),
        cost_estimate=cost,
    )(x_stacked, w_stacked)

    if t_pad != T or o_pad != O:
        out = out[:, :T, :O]
    return out


class MMOELinearBPallas:
    """JAX/Pallas equivalent of the PyTorch MMOELinearB module."""

    def __init__(self, in_features, out_features, expert_num, key,
                 compute_dtype=jnp.float32):
        assert in_features % expert_num == 0
        self.expert_num = expert_num
        self.in_features = in_features
        self.out_features = out_features
        self.r = in_features // expert_num
        # bf16 compute halves HBM traffic (the op is bandwidth-bound);
        # f32 default matches PyTorch numerics exactly.
        self.compute_dtype = compute_dtype
        # Deterministic init mimicking nn.Linear default: U(-1/sqrt(r), 1/sqrt(r)).
        bound = 1.0 / (self.r ** 0.5)
        keys = jax.random.split(key, expert_num)
        # Per-expert weights stored already transposed: (E, r, out_features).
        self.weights = jnp.stack(
            [
                jax.random.uniform(
                    k, (self.r, self.out_features), jnp.float32,
                    minval=-bound, maxval=bound,
                )
                for k in keys
            ],
            axis=0,
        )
        self._forward = jax.jit(self._forward_impl)

    def _forward_impl(self, x_tuple, weights):
        b, s, r = x_tuple[0].shape
        T = b * s
        out_dtype = x_tuple[0].dtype
        # Stack/reshape/cast happen inside jit so XLA fuses them with the
        # padding around the kernel (one pass over the activations).
        x_stacked = jnp.stack(
            [x.reshape(T, r).astype(self.compute_dtype) for x in x_tuple], axis=0
        )  # (E, T, r)
        w = weights.astype(self.compute_dtype)  # (E, r, O)
        y = mmoe_linear_b_stacked(x_stacked, w)  # (E, T, O)
        return tuple(
            y[i].reshape(b, s, self.out_features).astype(out_dtype)
            for i in range(self.expert_num)
        )

    def __call__(self, x_list):
        """x_list: list of E arrays, each (batch, seq, r). Returns list of E arrays."""
        assert len(x_list) == self.expert_num
        assert x_list[0].shape[-1] == self.r
        return list(self._forward(tuple(x_list), self.weights))


if __name__ == "__main__":
    key = jax.random.PRNGKey(0)
    k_w, k_x = jax.random.split(key)

    expert_num = 4
    in_features = 32           # => r = 8 per expert
    out_features = 16
    batch, seq = 2, 8

    module = MMOELinearBPallas(in_features, out_features, expert_num, k_w)
    r = module.r

    xs_keys = jax.random.split(k_x, expert_num)
    x_list = [
        jax.random.normal(k, (batch, seq, r), jnp.float32) for k in xs_keys
    ]

    # --- f32 path (matches PyTorch semantics) -------------------------------
    outputs = module(x_list)
    outputs = [jax.block_until_ready(o) for o in outputs]

    for i in range(expert_num):
        ref = jnp.einsum("bsr,ro->bso", x_list[i], module.weights[i])
        assert outputs[i].shape == (batch, seq, out_features)
        assert jnp.allclose(outputs[i], ref, atol=1e-4, rtol=1e-4)

    # --- bf16 compute path (bandwidth optimization; looser tolerance) -------
    module_bf16 = MMOELinearBPallas(
        in_features, out_features, expert_num, k_w, compute_dtype=jnp.bfloat16
    )
    outputs_bf16 = module_bf16(x_list)
    outputs_bf16 = [jax.block_until_ready(o) for o in outputs_bf16]
    for i in range(expert_num):
        ref = jnp.einsum("bsr,ro->bso", x_list[i], module_bf16.weights[i])
        assert outputs_bf16[i].shape == (batch, seq, out_features)
        assert jnp.allclose(outputs_bf16[i], ref, atol=5e-2, rtol=5e-2)

    print("KERNEL_OK")
</pallas_src>

<mosaic_0001>
module attributes {stable_mosaic.version = 11 : i64} {
  func.func @_expert_matmul_kernel(%arg0: i32, %arg1: i32, %arg2: i32, %arg3: memref<1x16x8xf32, #tpu.memory_space<vmem>>, %arg4: memref<1x8x128xf32, #tpu.memory_space<vmem>>, %arg5: memref<1x16x128xf32, #tpu.memory_space<vmem>>) attributes {dimension_semantics = [#tpu.dimension_semantics<parallel>, #tpu.dimension_semantics<parallel>, #tpu.dimension_semantics<parallel>], iteration_bounds = array<i64: 4, 1, 1>, scalar_prefetch = 0 : i64, scratch_operands = 0 : i64, tpu.core_type = #tpu.core_type<tc>, window_params = [{transform_indices = @transform_0, window_bounds = array<i64: 1, 16, 8>}, {transform_indices = @transform_1, window_bounds = array<i64: 1, 8, 128>}, {transform_indices = @transform_2, window_bounds = array<i64: 1, 16, 128>}]} {
    %c0 = arith.constant 0 : index
    %c0_0 = arith.constant 0 : index
    %c0_1 = arith.constant 0 : index
    %0 = vector.load %arg3[%c0, %c0_0, %c0_1] : memref<1x16x8xf32, #tpu.memory_space<vmem>>, vector<1x16x8xf32>
    %1 = vector.shape_cast %0 : vector<1x16x8xf32> to vector<16x8xf32>
    %c0_2 = arith.constant 0 : index
    %c0_3 = arith.constant 0 : index
    %c0_4 = arith.constant 0 : index
    %2 = vector.load %arg4[%c0_2, %c0_3, %c0_4] : memref<1x8x128xf32, #tpu.memory_space<vmem>>, vector<1x8x128xf32>
    %3 = vector.shape_cast %2 : vector<1x8x128xf32> to vector<8x128xf32>
    %cst = arith.constant dense<0.000000e+00> : vector<16x128xf32>
    %4 = tpu.matmul %1, %3, %cst {dimension_numbers = #tpu.dot_dimension_numbers<[1], [0], [0], [1], [0, 0, 1, 1], [], []>} : vector<16x8xf32>, vector<8x128xf32>, vector<16x128xf32> -> vector<16x128xf32>
    %c0_5 = arith.constant 0 : index
    %c0_6 = arith.constant 0 : index
    %c0_7 = arith.constant 0 : index
    %5 = vector.load %arg5[%c0_5, %c0_6, %c0_7] : memref<1x16x128xf32, #tpu.memory_space<vmem>>, vector<1x16x128xf32>
    %6 = vector.shape_cast %5 : vector<1x16x128xf32> to vector<16x128xf32>
    %7 = vector.shape_cast %4 : vector<16x128xf32> to vector<1x16x128xf32>
    tpu.vector_store %arg5[%c0_5, %c0_6, %c0_7], %7 {strides = array<i32>} : memref<1x16x128xf32, #tpu.memory_space<vmem>>, vector<1x16x128xf32>,
    return
  }
  func.func @transform_0(%arg0: i32, %arg1: i32, %arg2: i32) -> (i32, i32, i32) {
    %c0_i32 = arith.constant 0 : i32
    %c0_i32_0 = arith.constant 0 : i32
    return %arg0, %arg2, %c0_i32 : i32, i32, i32
  }
  func.func @transform_1(%arg0: i32, %arg1: i32, %arg2: i32) -> (i32, i32, i32) {
    %c0_i32 = arith.constant 0 : i32
    %c0_i32_0 = arith.constant 0 : i32
    return %arg0, %c0_i32, %arg1 : i32, i32, i32
  }
  func.func @transform_2(%arg0: i32, %arg1: i32, %arg2: i32) -> (i32, i32, i32) {
    %c0_i32 = arith.constant 0 : i32
    return %arg0, %arg2, %arg1 : i32, i32, i32
  }
}

</mosaic_0001>

<llo_original>
// kernel: _forward_impl.1
$region0: #{_forward_impl.1}
  #allocation0 [shape = 'u32[]', space=smem, size = 0x4, offset = 0x4, fixed_abs, tag = 'smem constant byte address 0x4 - core index']
  #allocation1 [shape = 'u32[144,128]{1,0:T(1,128)}', space=vmem, size = 0x12000, scoped, tag = 'internal scratch']
  %s0 = inlined_call_operand.vmem [shape: f32[4,16,8], index: 0, kind: input, shape index: {}]
  %s1 = inlined_call_operand.vmem [shape: f32[4,8,128], index: 1, kind: input, shape index: {}]
  %s2 = inlined_call_operand.vmem [shape: f32[4,16,128], index: 2, kind: output, shape index: {}]
  %s3 = sld [smem:[#allocation0]]
  $region41: #{_forward_impl.1} parent=0
    _
  %s5 = ssub.s32 1, %s3
  %s6 = scalar_select 0, %s5, %s3
  loop: start=0, step=1, limit=6
  $region2: #{_forward_impl.1} parent=0 // loop_pre_header
    _
  $region3: #{_forward_impl.1} parent=0 // loop_header
    %s8 = sphi 0, %s12
    %p9 = scmp.ge.s32.totalorder %s8, 6
    %s15 = sphi 0, %s34
    %s16 = sphi 0, %s30
    %s17 = sphi 0, %s26
    %s18 = sphi 0, %s15
    %s19 = sphi 0, %s16
    %s20 = sphi 0, %s17
    %s21 = sphi 0, %s18
    %s22 = sphi 0, %s19
    %s23 = sphi 0, %s20
    %s39 = sphi 0, %s41
    %s42 = sphi 0, %s39
    %s43 = sphi 0, %s42
    %s59 = sphi 0, %s43
    %s67 = sphi 0, %s69
    %s70 = sphi 0, %s67
    %s71 = sphi 0, %s70
    %s87 = sphi 0, %s71
    %s97 = sphi 0, %s99
    %s100 = sphi 0, %s97
    %s101 = sphi 0, %s100
    %s117 = sphi 0, %s101
  $region4: #{_forward_impl.1} parent=0 // loop_header_branch
    %11 = sbr.rel (%p9) target = $region8
  $region5: #{_forward_impl.1} parent=0 // loop_body
    %s13 = ssub.s32 %s8, 1
    %s14 = ssub.s32 %s8, 2
    %s24 = sadd.s32 1, %s17
    %p25 = scmp.ge.s32.totalorder %s24, 1
    %s26 = scalar_select %p25, 0, %s24
    %s27 = sadd.s32 1, %s16
    %s28 = scalar_select %p25, %s27, %s16
    %p29 = scmp.ge.s32.totalorder %s28, 1
    %s30 = scalar_select %p29, 0, %s28
    %s31 = sadd.s32 1, %s15
    %s32 = scalar_select %p29, %s31, %s15
    %p33 = scmp.ge.s32.totalorder %s32, 4
    %s34 = scalar_select %p33, 0, %s32
    %s35 = ssub.s32 %s15, %s34
    %s36 = ssub.s32 %s17, %s26
    %s37 = sor.u32 %s35, %s36
    %p38 = scmp.eq.s32.totalorder %s37, 0
    %s40 = sadd.s32 %s39, 1
    %s41 = scalar_select %p38, %s39, %s40
    %p44 = pneg %p38
    %p45 = scmp.eq.s32.totalorder %s8, 3
    %p46 = por %p44, %p45
    %p47 = scmp.ne.s32.totalorder %s39, %s42
    %p48 = scmp.eq.s32.totalorder %s8, 0
    %p49 = por %p47, %p48
    %p50 = scmp.ne.s32.totalorder %s39, %s42
    %p51 = scmp.eq.s32.totalorder %s13, 3
    %p52 = por %p50, %p51
    %p53 = scmp.ne.s32.totalorder %s42, %s43
    %p54 = scmp.eq.s32.totalorder %s13, 0
    %p55 = por %p53, %p54
    %p56 = scmp.ne.s32.totalorder %s42, %s43
    %p57 = scmp.eq.s32.totalorder %s14, 3
    %p58 = por %p56, %p57
    %p60 = scmp.ne.s32.totalorder %s43, %s59
    %p61 = scmp.eq.s32.totalorder %s14, 0
    %p62 = por %p60, %p61
    %s63 = ssub.s32 %s15, %s34
    %s64 = ssub.s32 %s16, %s30
    %s65 = sor.u32 %s63, %s64
    %p66 = scmp.eq.s32.totalorder %s65, 0
    %s68 = sadd.s32 %s67, 1
    %s69 = scalar_select %p66, %s67, %s68
    %p72 = pneg %p66
    %p73 = scmp.eq.s32.totalorder %s8, 3
    %p74 = por %p72, %p73
    %p75 = scmp.ne.s32.totalorder %s67, %s70
    %p76 = scmp.eq.s32.totalorder %s8, 0
    %p77 = por %p75, %p76
    %p78 = scmp.ne.s32.totalorder %s67, %s70
    %p79 = scmp.eq.s32.totalorder %s13, 3
    %p80 = por %p78, %p79
    %p81 = scmp.ne.s32.totalorder %s70, %s71
    %p82 = scmp.eq.s32.totalorder %s13, 0
    %p83 = por %p81, %p82
    %p84 = scmp.ne.s32.totalorder %s70, %s71
    %p85 = scmp.eq.s32.totalorder %s14, 3
    %p86 = por %p84, %p85
    %p88 = scmp.ne.s32.totalorder %s71, %s87
    %p89 = scmp.eq.s32.totalorder %s14, 0
    %p90 = por %p88, %p89
    %s91 = ssub.s32 %s15, %s34
    %s92 = ssub.s32 %s17, %s26
    %s93 = sor.u32 %s91, %s92
    %s94 = ssub.s32 %s16, %s30
    %s95 = sor.u32 %s93, %s94
    %p96 = scmp.eq.s32.totalorder %s95, 0
    %s98 = sadd.s32 %s97, 1
    %s99 = scalar_select %p96, %s97, %s98
    %p102 = pneg %p96
    %p103 = scmp.eq.s32.totalorder %s8, 3
    %p104 = por %p102, %p103
    %p105 = scmp.ne.s32.totalorder %s97, %s100
    %p106 = scmp.eq.s32.totalorder %s8, 0
    %p107 = por %p105, %p106
    %p108 = scmp.ne.s32.totalorder %s97, %s100
    %p109 = scmp.eq.s32.totalorder %s13, 3
    %p110 = por %p108, %p109
    %p111 = scmp.ne.s32.totalorder %s100, %s101
    %p112 = scmp.eq.s32.totalorder %s13, 0
    %p113 = por %p111, %p112
    %p114 = scmp.ne.s32.totalorder %s100, %s101
    %p115 = scmp.eq.s32.totalorder %s14, 3
    %p116 = por %p114, %p115
    %p118 = scmp.ne.s32.totalorder %s101, %s117
    %p119 = scmp.eq.s32.totalorder %s14, 0
    %p120 = por %p118, %p119
    %p121 = scmp.le.s32.totalorder 1, %s8
    %p122 = scmp.lt.s32.totalorder %s8, 5
    %p123 = pnand %p121, %p122
    %p124 = pneg %p123
    // Predicated region
    $region9: #{_forward_impl.1} parent=5 // pred_check
      _
    $region10: #{_forward_impl.1} parent=5 // pred_check_branch
      %126 = sbr.rel (%p123) target = $region12
    $region11: #{_forward_impl.1} parent=5 // pred_region
      %s127 = ssub.s32 %s8, 1
    $region12: #{_forward_impl.1} parent=5 // pred_fallthru
      _
    %p128 = scmp.lt.s32.totalorder %s8, 4
    // Predicated region
    $region13: #{_forward_impl.1} parent=5 // pred_check
      %p129 = pneg %p128
    $region14: #{_forward_impl.1} parent=5 // pred_check_branch
      %131 = sbr.rel (%p129) target = $region16
    $region15: #{_forward_impl.1} parent=5 // pred_region
      // Predicated region
      $region17: #{_forward_impl.1} parent=15 // pred_check
        %p132 = pneg %p49
      $region18: #{_forward_impl.1} parent=15 // pred_check_branch
        %134 = sbr.rel (%p132) target = $region20
      $region19: #{_forward_impl.1} parent=15 // pred_region
        %s135 = smul.u32 2, %s17
        %p136 = scmp.lt.s32.totalorder %s15, 3
        %s137 = scalar_select %p136, %s15, 3
        %p138 = scmp.lt.s32.totalorder %s135, 1
        %s139 = scalar_select %p138, %s135, 1
        %s140 = smul.addr %s137, 2
        %s141 = sadd.s32 %s139, %s140
        %s142 = smul.addr %s141, 8
        %s143 = scalar_lea.vmem %s0, %s142
        %s144 = smul.u32 2, %s17
      $region20: #{_forward_impl.1} parent=15 // pred_fallthru
        _
      // Predicated region
      $region21: #{_forward_impl.1} parent=15 // pred_check
        %p145 = pneg %p77
      $region22: #{_forward_impl.1} parent=15 // pred_check_branch
        %147 = sbr.rel (%p145) target = $region24
      $region23: #{_forward_impl.1} parent=15 // pred_region
        %p148 = scmp.lt.s32.totalorder %s15, 3
        %s149 = scalar_select %p148, %s15, 3
        %p150 = scmp.lt.s32.totalorder %s16, 0
        %s151 = scalar_select %p150, %s16, 0
        %s152 = sadd.s32 %s151, %s149
        %s153 = smul.addr %s152, 8
        %s154 = scalar_lea.vmem %s1, %s153
      $region24: #{_forward_impl.1} parent=15 // pred_fallthru
        _
    $region16: #{_forward_impl.1} parent=5 // pred_fallthru
      _
    %p155 = scmp.le.s32.totalorder 1, %s8
    %p156 = scmp.lt.s32.totalorder %s8, 5
    %p157 = pnand %p155, %p156
    %p158 = pneg %p157
    // Predicated region
    $region25: #{_forward_impl.1} parent=5 // pred_check
      _
    $region26: #{_forward_impl.1} parent=5 // pred_check_branch
      %160 = sbr.rel (%p157) target = $region28
    $region27: #{_forward_impl.1} parent=5 // pred_region
      %s161 = ssub.s32 %s8, 1
      %s162 = smul.u32 2, %s20
      %p163 = scmp.lt.s32.totalorder %s18, 3
      %s164 = scalar_select %p163, %s18, 3
      %p165 = scmp.lt.s32.totalorder %s162, 1
      %s166 = scalar_select %p165, %s162, 1
      %s167 = smul.addr %s164, 2
      %s168 = sadd.s32 %s166, %s167
      %s169 = smul.addr %s168, 8
      %s170 = scalar_lea.vmem %s0, %s169
      %p171 = pneg %p55
      %p172 = pneg %p52
      %p173 = scmp.lt.s32.totalorder %s18, 3
      %s174 = scalar_select %p173, %s18, 3
      %p175 = scmp.lt.s32.totalorder %s19, 0
      %s176 = scalar_select %p175, %s19, 0
      %s177 = sadd.s32 %s176, %s174
      %s178 = smul.addr %s177, 8
      %s179 = scalar_lea.vmem %s1, %s178
      %p180 = pneg %p83
      %p181 = pneg %p80
      %p182 = pneg %p113
      %p183 = pneg %p110
      %s184 = smul.u32 2, %s20
      %p185 = scmp.lt.s32.totalorder %s18, 3
      %s186 = scalar_select %p185, %s18, 3
      %p187 = scmp.lt.s32.totalorder %s184, 1
      %s188 = scalar_select %p187, %s184, 1
      %p189 = scmp.lt.s32.totalorder %s19, 0
      %s190 = scalar_select %p189, %s19, 0
      %s191 = sadd.s32 %s190, %s188
      %s192 = smul.addr %s186, 2
      %s193 = sadd.s32 %s191, %s192
      %s194 = smul.addr %s193, 8
      %s195 = scalar_lea.vmem %s2, %s194
      %s196 = smul.u32 2, %s20
      %p197 = scmp.lt.s32.totalorder %s18, 3
      %s198 = scalar_select %p197, %s18, 3
      %p199 = scmp.lt.s32.totalorder %s196, 1
      %s200 = scalar_select %p199, %s196, 1
      %s201 = smul.addr %s198, 2
      %s202 = sadd.s32 %s200, %s201
      %s203 = smul.addr %s202, 8
      %s204 = scalar_lea.vmem %s0, %s203
      %s205 = smul.u32 2, %s20
      %p206 = scmp.lt.s32.totalorder %s18, 3
      %s207 = scalar_select %p206, %s18, 3
      %p208 = scmp.lt.s32.totalorder %s19, 0
      %s209 = scalar_select %p208, %s19, 0
      %s210 = sadd.s32 %s209, %s207
      %s211 = smul.addr %s210, 8
      %s212 = scalar_lea.vmem %s1, %s211
      %s213 = smul.u32 2, %s20
      %p214 = scmp.lt.s32.totalorder %s18, 3
      %s215 = scalar_select %p214, %s18, 3
      %p216 = scmp.lt.s32.totalorder %s213, 1
      %s217 = scalar_select %p216, %s213, 1
      %p218 = scmp.lt.s32.totalorder %s19, 0
      %s219 = scalar_select %p218, %s19, 0
      %s220 = sadd.s32 %s219, %s217
      %s221 = smul.addr %s215, 2
      %s222 = sadd.s32 %s220, %s221
      %s223 = smul.addr %s222, 8
      %s224 = scalar_lea.vmem %s2, %s223
      %s225 = smul.u32 2, %s20
      %v226 = vld [vmem:[%s204] sm:$0xff]
      %v227 = vld [vmem:[%s204 + $0x8] sm:$0xff]
      %v228 = vld [vmem:[%s212] sm:$0xff]
      %vm229 = vcmask 64512
      %v231 = vsel %vm229, %v226, 0
      %v234 = vsel %vm229, %v227, 0
      %236 = vmatprep.subr.mxu0 0.0
      %237 = vmatpush1.msra.mxu0 %v228
      %238 = vmatprep.subr.mxu0 0.0
      %239 = vmatpush1.msra.mxu0 0.0
      %240 = vmatprep.subr.mxu0 0.0
      %241 = vmatpush1.msra.mxu0 0.0
      %242 = vmatprep.subr.mxu0 0.0
      %243 = vmatpush1.msra.mxu0 0.0
      %244 = vmatprep.subr.mxu0 0.0
      %245 = vmatpush1.msra.mxu0 0.0
      %246 = vmatprep.subr.mxu0 0.0
      %247 = vmatpush1.msra.mxu0 0.0
      %248 = vmatprep.subr.mxu0 0.0
      %249 = vmatpush1.msra.mxu0 0.0
      %250 = vmatprep.subr.mxu0 0.0
      %251 = vmatpush1.msra.mxu0 0.0
      %252 = vmatprep.subr.mxu0 0.0
      %253 = vmatpush1.msra.mxu0 0.0
      %254 = vmatprep.subr.mxu0 0.0
      %255 = vmatpush1.msra.mxu0 0.0
      %256 = vmatprep.subr.mxu0 0.0
      %257 = vmatpush1.msra.mxu0 0.0
      %258 = vmatprep.subr.mxu0 0.0
      %259 = vmatpush1.msra.mxu0 0.0
      %260 = vmatprep.subr.mxu0 0.0
      %261 = vmatpush1.msra.mxu0 0.0
      %262 = vmatprep.subr.mxu0 0.0
      %263 = vmatpush1.msra.mxu0 0.0
      %264 = vmatprep.subr.mxu0 0.0
      %265 = vmatpush1.msra.mxu0 0.0
      %266 = vmatprep.subr.mxu0 0.0
      %267 = vmatpush1.msra.mxu0 0.0
      %268 = vmatprep.subr.mxu0 0.0
      %269 = vmatpush1.msra.mxu0 0.0
      %270 = vmatprep.subr.mxu0 0.0
      %271 = vmatpush1.msra.mxu0 0.0
      %272 = vmatprep.subr.mxu0 0.0
      %273 = vmatpush1.msra.mxu0 0.0
      %274 = vmatprep.subr.mxu0 0.0
      %275 = vmatpush1.msra.mxu0 0.0
      %276 = vmatprep.subr.mxu0 0.0
      %277 = vmatpush1.msra.mxu0 0.0
      %278 = vmatprep.subr.mxu0 0.0
      %279 = vmatpush1.msra.mxu0 0.0
      %280 = vmatprep.subr.mxu0 0.0
      %281 = vmatpush1.msra.mxu0 0.0
      %282 = vmatprep.subr.mxu0 0.0
      %283 = vmatpush1.msra.mxu0 0.0
      %284 = vmatprep.subr.mxu0 0.0
      %285 = vmatpush1.msra.mxu0 0.0
      %286 = vmatprep.subr.mxu0 0.0
      %287 = vmatpush1.msra.mxu0 0.0
      %288 = vmatprep.subr.mxu0 0.0
      %289 = vmatpush1.msra.mxu0 0.0
      %290 = vmatprep.subr.mxu0 0.0
      %291 = vmatpush1.msra.mxu0 0.0
      %292 = vmatprep.subr.mxu0 0.0
      %293 = vmatpush1.msra.mxu0 0.0
      %294 = vmatprep.subr.mxu0 0.0
      %295 = vmatpush1.msra.mxu0 0.0
      %296 = vmatprep.subr.mxu0 0.0
      %297 = vmatpush1.msra.mxu0 0.0
      %298 = vmatprep.subr.mxu0 0.0
      %299 = vmatpush1.msra.mxu0 0.0
      %300 = vmatprep.mubr.f32.mxu0 0.0
      %301 = vmatmul.mubr.f32.gmra.mrb[0].mxu0 %v231
      %v302 = vpop.f32.mrb[0].mxu0
      %v303 = vadd.f32 0.0, %v302
      %v304 = vpop.f32.mrb[0].mxu0
      %305 = vmatprep.mubr.f32.mxu0 0.0
      %306 = vmatmul.mubr.f32.gmra.mrb[0].mxu0 %v234
      %v307 = vpop.f32.mrb[0].mxu0
      %v308 = vadd.f32 0.0, %v307
      %v309 = vpop.f32.mrb[0].mxu0
      %310 = vdwg.mxu0
      %311 = vst [vmem:[%s224] sm:$0xff] %v303
      %312 = vst [vmem:[%s224 + $0x8] sm:$0xff] %v308
      %s313 = smul.u32 2, %s20
      %p314 = scmp.lt.s32.totalorder %s18, 3
      %s315 = scalar_select %p314, %s18, 3
      %p316 = scmp.lt.s32.totalorder %s313, 1
      %s317 = scalar_select %p316, %s313, 1
      %p318 = scmp.lt.s32.totalorder %s19, 0
      %s319 = scalar_select %p318, %s19, 0
      %s320 = sadd.s32 %s319, %s317
      %s321 = smul.addr %s315, 2
      %s322 = sadd.s32 %s320, %s321
      %s323 = smul.addr %s322, 8
      %s324 = scalar_lea.vmem %s2, %s323
      // Predicated region
      $region29: #{_forward_impl.1} parent=27 // pred_check
        %p325 = pneg %p110
      $region30: #{_forward_impl.1} parent=27 // pred_check_branch
        %327 = sbr.rel (%p325) target = $region32
      $region31: #{_forward_impl.1} parent=27 // pred_region
        %s328 = smul.u32 2, %s20
      $region32: #{_forward_impl.1} parent=27 // pred_fallthru
        _
    $region28: #{_forward_impl.1} parent=5 // pred_fallthru
      _
    %p329 = scmp.le.s32.totalorder 2, %s8
    // Predicated region
    $region33: #{_forward_impl.1} parent=5 // pred_check
      %p330 = pneg %p329
    $region34: #{_forward_impl.1} parent=5 // pred_check_branch
      %332 = sbr.rel (%p330) target = $region36
    $region35: #{_forward_impl.1} parent=5 // pred_region
      %s333 = ssub.s32 %s8, 2
      // Predicated region
      $region37: #{_forward_impl.1} parent=35 // pred_check
        %p334 = pneg %p116
      $region38: #{_forward_impl.1} parent=35 // pred_check_branch
        %336 = sbr.rel (%p334) target = $region40
      $region39: #{_forward_impl.1} parent=35 // pred_region
        %s337 = smul.u32 2, %s23
        %p338 = scmp.lt.s32.totalorder %s21, 3
        %s339 = scalar_select %p338, %s21, 3
        %p340 = scmp.lt.s32.totalorder %s337, 1
        %s341 = scalar_select %p340, %s337, 1
        %p342 = scmp.lt.s32.totalorder %s22, 0
        %s343 = scalar_select %p342, %s22, 0
        %s344 = sadd.s32 %s343, %s341
        %s345 = smul.addr %s339, 2
        %s346 = sadd.s32 %s344, %s345
        %s347 = smul.addr %s346, 8
        %s348 = scalar_lea.vmem %s2, %s347
      $region40: #{_forward_impl.1} parent=35 // pred_fallthru
        _
    $region36: #{_forward_impl.1} parent=5 // pred_fallthru
      _
  $region6: #{_forward_impl.1} parent=0 // loop_footer
    %s12 = sadd.s32 1, %s8
  $region7: #{_forward_impl.1} parent=0 // loop_footer_branch
    %7 = sbr.rel target = $region3
  $region8: #{_forward_impl.1} parent=0 // loop_exit
    _

</llo_original>
